<compile_context>
chip_gen: v6e
topology: v6e:2x2x1
jax: 0.10.0
libtpu: 0.0.40
codegen_flags: <defaults>
</compile_context>

<pallas_src>
import math
import functools

import jax
import jax.numpy as jnp
from jax.experimental import pallas as pl
from jax.experimental.pallas import tpu as pltpu


# --------------------------------------------------------------------------- #
# Kernel
# --------------------------------------------------------------------------- #
def _coupling_kernel(transformed_features, num_hidden_layers, *refs):
    """refs = (xT_ref, w0, b0, w1, b1, ..., w_final, b_final, o_ref).

    xT_ref : (dim, TB)   feature-major tile, batch on the lane axis.
    w_l    : (out, in)   PyTorch convention (no transpose needed).
    b_l    : (out, 1)    broadcasts over the lane (batch) axis.
    o_ref  : (t, TB)     transformed half only (x1 + MLP(x2)).
    """
    x_ref = refs[0]
    o_ref = refs[-1]
    params = refs[1:-1]
    t = transformed_features

    x1 = x_ref[:t, :].astype(jnp.float32)   # (t, TB)
    h = x_ref[t:, :]                         # (dim - t, TB) = x2^T

    # Hidden (Linear + ReLU) blocks — Python loop unrolls at trace time.
    for li in range(num_hidden_layers):
        w = params[2 * li][...]
        b = params[2 * li + 1][...]
        h = jnp.dot(w, h.astype(w.dtype), preferred_element_type=jnp.float32) + b
        h = jnp.maximum(h, 0.0)

    # Final Linear (no activation).
    wf = params[2 * num_hidden_layers][...]
    bf = params[2 * num_hidden_layers + 1][...]
    y = jnp.dot(wf, h.astype(wf.dtype), preferred_element_type=jnp.float32) + bf

    # Lane-dense, full-block store of the transformed half only.
    o_ref[...] = (x1 + y).astype(o_ref.dtype)


# --------------------------------------------------------------------------- #
# Parameter construction / preparation
# --------------------------------------------------------------------------- #
def init_coupling_params(key, dim, channel_mults):
    """Deterministic init matching the PyTorch module's layer shapes.

    Returns list of (W, b) in PyTorch convention: W is [out, in], b is [out].
    """
    transformed = dim // 2
    num_params = dim - transformed
    channels = [num_params] + [int(num_params * m) for m in channel_mults]
    pairs = list(zip(channels[:-1], channels[1:]))
    # hidden (Linear+ReLU) blocks use pairs[:-1]; final maps pairs[-1][0] -> transformed
    layer_dims = [(ci, cj) for ci, cj in pairs[:-1]] + [(pairs[-1][0], transformed)]

    params = []
    for fan_in, fan_out in layer_dims:
        key, kw, kb = jax.random.split(key, 3)
        bound = 1.0 / math.sqrt(fan_in)  # PyTorch nn.Linear default init bound
        w = jax.random.uniform(kw, (fan_out, fan_in), jnp.float32, -bound, bound)
        b = jax.random.uniform(kb, (fan_out,), jnp.float32, -bound, bound)
        params.append((w, b))
    return params


def prepare_coupling_params(params, weight_dtype=jnp.float32):
    """One-time prep for the feature-major kernel.

    Weights are kept in PyTorch [out, in] convention (the kernel computes
    W @ x2T directly, so no transposes at all).  Biases become [out, 1] so they
    broadcast over the lane/batch axis.  Optionally store weights as bf16
    (halves weight DMA/VMEM; native MXU operand on v5e/v6e); accumulation stays
    f32 in-kernel and biases stay f32.
    """
    flat = []
    for w, b in params:
        flat.append(jnp.asarray(w, dtype=weight_dtype))              # [out, in]
        flat.append(jnp.asarray(b, dtype=jnp.float32).reshape(-1, 1))  # [out, 1]
    return tuple(flat)


# --------------------------------------------------------------------------- #
# Tiling / wrapper
# --------------------------------------------------------------------------- #
def _round_up(v, m):
    return ((v + m - 1) // m) * m


def _choose_batch_tile(batch, dim, itemsize, target_bytes=2 << 20, lane=128):
    """Batch (lane-axis) tile: multiple of 128, sized so the x tile is ~target_bytes,
    and capped so large batches get >= 2 grid steps (both v7x TensorCores busy)."""
    tb = max(lane, (target_bytes // max(1, dim * itemsize)) // lane * lane)
    padded = _round_up(batch, lane)
    tb = min(tb, padded)                                   # never exceed padded batch
    if padded >= 2 * lane:                                 # enough rows for >= 2 steps
        tb = min(tb, _round_up(pl.cdiv(batch, 2), lane))
    return max(tb, lane)


def _coupling_half_call(xT, flat_params, transformed_features, block_b):
    """Feature-major Pallas call: xT is (dim, B_pad); returns (t, B_pad) = x1 + MLP(x2)."""
    dim, b_pad = xT.shape
    t = transformed_features
    num_hidden = len(flat_params) // 2 - 1
    itemsize = jnp.dtype(xT.dtype).itemsize
    grid = (b_pad // block_b,)

    kernel = functools.partial(_coupling_kernel, t, num_hidden)

    param_bytes = sum(int(a.size) * jnp.dtype(a.dtype).itemsize for a in flat_params)
    # Parameters use a constant index_map (grid-invariant).  Single-buffer them
    # only when their footprint is big enough to matter for VMEM (v7x: 64 MiB).
    single_buffer_params = param_bytes > (2 << 20)

    in_specs = [pl.BlockSpec((dim, block_b), lambda i: (0, i))]
    for a in flat_params:
        if single_buffer_params:
            in_specs.append(
                pl.BlockSpec(a.shape, lambda i: (0, 0), pipeline_mode=pl.Buffered(1)))
        else:
            in_specs.append(pl.BlockSpec(a.shape, lambda i: (0, 0)))
    out_spec = pl.BlockSpec((t, block_b), lambda i: (0, i))

    # Advisory cost estimate for the XLA scheduler (mem-bound kernel).
    flops = 0
    for li in range(num_hidden + 1):
        out_f, in_f = flat_params[2 * li].shape
        flops += 2 * b_pad * in_f * out_f
    io_bytes = (dim + t) * b_pad * itemsize + param_bytes
    cost = pl.CostEstimate(flops=int(flops), transcendentals=0,
                           bytes_accessed=int(io_bytes))

    # VMEM budget: double-buffered in/out tiles + resident params + headroom,
    # no artificial floor above platform defaults, capped for v7x's 64 MiB.
    x_tile = dim * block_b * itemsize
    o_tile = t * block_b * itemsize
    vmem_need = 2 * (x_tile + o_tile) + (1 if single_buffer_params else 2) * param_bytes
    vmem_limit = int(min(max(vmem_need + (4 << 20), 16 << 20), 48 << 20))

    return pl.pallas_call(
        kernel,
        out_shape=jax.ShapeDtypeStruct((t, b_pad), xT.dtype),
        grid=grid,
        in_specs=in_specs,
        out_specs=out_spec,
        compiler_params=pltpu.CompilerParams(
            dimension_semantics=("parallel",),
            vmem_limit_bytes=vmem_limit,
        ),
        cost_estimate=cost,
    )(xT, *flat_params)


def coupling_layer_forward(x, flat_params, transformed_features, *,
                           block_b=None, target_tile_bytes=2 << 20):
    """CouplingLayer.forward.  `flat_params` comes from prepare_coupling_params.

    The kernel runs in feature-major layout; the (cheap, mem-bound) transpose /
    concat layout plumbing stays in the wrapper.  Callers that already hold
    feature-major activations can call _coupling_half_call directly and skip it.
    """
    B, dim = x.shape
    t = transformed_features
    itemsize = jnp.dtype(x.dtype).itemsize

    if block_b is None:
        block_b = _choose_batch_tile(B, dim, itemsize, target_tile_bytes)
    b_pad = _round_up(B, block_b)
    x_pad = x if b_pad == B else jnp.pad(x, ((0, b_pad - B), (0, 0)))
    xT = x_pad.T                                   # (dim, b_pad): batch on lanes

    out_t = _coupling_half_call(xT, flat_params, t, block_b)   # (t, b_pad)

    x1_new = out_t.T if b_pad == B else out_t[:, :B].T          # (B, t)
    return jnp.concatenate([x1_new, x[:, t:]], axis=1)          # [x1 + MLP(x2), x2]


# --------------------------------------------------------------------------- #
# Pure-JAX reference (mirrors the PyTorch forward)
# --------------------------------------------------------------------------- #
def coupling_layer_reference(x, params, transformed_features):
    hi = jax.lax.Precision.HIGHEST
    t = transformed_features
    x1, x2 = x[:, :t], x[:, t:]
    h = x2
    for w, b in params[:-1]:
        h = jnp.maximum(jnp.dot(h, w.T, precision=hi) + b, 0.0)
    wf, bf = params[-1]
    y = jnp.dot(h, wf.T, precision=hi) + bf
    return jnp.concatenate([x1 + y, x2], axis=1)


# --------------------------------------------------------------------------- #
# Demo / self-test
# --------------------------------------------------------------------------- #
if __name__ == "__main__":
    key = jax.random.PRNGKey(0)
    B = 200                      # not a multiple of 128 -> exercises batch padding + 2-step grid
    dim = 8                      # -> transformed_features = 4, num_params = 4
    channel_mults = [8, 8]       # MLP: Linear(4,32)+ReLU, Linear(32,4)

    kx, kp = jax.random.split(key)
    x = jax.random.normal(kx, (B, dim), jnp.float32)
    transformed = dim // 2
    params = init_coupling_params(kp, dim, channel_mults)
    ref = coupling_layer_reference(x, params, transformed)

    # f32 weights.
    flat_f32 = prepare_coupling_params(params)                   # one-time prep
    out = jax.block_until_ready(coupling_layer_forward(x, flat_f32, transformed))
    assert out.shape == (B, dim) and out.dtype == x.dtype
    assert jnp.allclose(out, ref, atol=1e-2, rtol=1e-2), "f32 mismatch vs reference"

    # bf16 weights (v5e/v6e MXU-native; f32 accumulation) — looser tolerance.
    flat_bf16 = prepare_coupling_params(params, weight_dtype=jnp.bfloat16)
    out_bf = jax.block_until_ready(coupling_layer_forward(x, flat_bf16, transformed))
    assert out_bf.shape == (B, dim) and out_bf.dtype == x.dtype
    assert jnp.allclose(out_bf, ref, atol=5e-2, rtol=5e-2), "bf16 mismatch vs reference"

    print("KERNEL_OK")
</pallas_src>

<mosaic_0001>
module attributes {stable_mosaic.version = 11 : i64} {
  func.func @_coupling_kernel(%arg0: i32, %arg1: memref<8x128xf32, #tpu.memory_space<vmem>>, %arg2: memref<32x4xf32, #tpu.memory_space<vmem>>, %arg3: memref<32x1xf32, #tpu.memory_space<vmem>>, %arg4: memref<4x32xf32, #tpu.memory_space<vmem>>, %arg5: memref<4x1xf32, #tpu.memory_space<vmem>>, %arg6: memref<4x128xf32, #tpu.memory_space<vmem>>) attributes {dimension_semantics = [#tpu.dimension_semantics<parallel>], iteration_bounds = array<i64: 2>, scalar_prefetch = 0 : i64, scratch_operands = 0 : i64, tpu.core_type = #tpu.core_type<tc>, window_params = [{transform_indices = @transform_0, window_bounds = array<i64: 8, 128>}, {pipeline_mode = #tpu.pipeline_mode<synchronous>, transform_indices = @transform_1, window_bounds = array<i64: 32, 4>}, {pipeline_mode = #tpu.pipeline_mode<synchronous>, transform_indices = @transform_2, window_bounds = array<i64: 32, 1>}, {pipeline_mode = #tpu.pipeline_mode<synchronous>, transform_indices = @transform_3, window_bounds = array<i64: 4, 32>}, {pipeline_mode = #tpu.pipeline_mode<synchronous>, transform_indices = @transform_4, window_bounds = array<i64: 4, 1>}, {transform_indices = @transform_5, window_bounds = array<i64: 4, 128>}]} {
    %c0 = arith.constant 0 : index
    %c0_0 = arith.constant 0 : index
    %0 = vector.load %arg1[%c0, %c0_0] : memref<8x128xf32, #tpu.memory_space<vmem>>, vector<4x128xf32>
    %c4 = arith.constant 4 : index
    %c0_1 = arith.constant 0 : index
    %1 = vector.load %arg1[%c4, %c0_1] : memref<8x128xf32, #tpu.memory_space<vmem>>, vector<4x128xf32>
    %c0_2 = arith.constant 0 : index
    %c0_3 = arith.constant 0 : index
    %2 = vector.load %arg2[%c0_2, %c0_3] : memref<32x4xf32, #tpu.memory_space<vmem>>, vector<32x4xf32>
    %c0_4 = arith.constant 0 : index
    %c0_5 = arith.constant 0 : index
    %3 = vector.load %arg3[%c0_4, %c0_5] : memref<32x1xf32, #tpu.memory_space<vmem>>, vector<32x1xf32>
    %cst = arith.constant dense<0.000000e+00> : vector<32x128xf32>
    %4 = tpu.matmul %2, %1, %cst {dimension_numbers = #tpu.dot_dimension_numbers<[1], [0], [0], [1], [0, 0, 1, 1], [], []>} : vector<32x4xf32>, vector<4x128xf32>, vector<32x128xf32> -> vector<32x128xf32>
    %5 = vector.broadcast %3 : vector<32x1xf32> to vector<32x128xf32>
    %6 = arith.addf %4, %5 : vector<32x128xf32>
    %cst_6 = arith.constant 0.000000e+00 : f32
    %7 = vector.broadcast %cst_6 : f32 to vector<32x128xf32>
    %8 = arith.maximumf %6, %7 : vector<32x128xf32>
    %c0_7 = arith.constant 0 : index
    %c0_8 = arith.constant 0 : index
    %9 = vector.load %arg4[%c0_7, %c0_8] : memref<4x32xf32, #tpu.memory_space<vmem>>, vector<4x32xf32>
    %c0_9 = arith.constant 0 : index
    %c0_10 = arith.constant 0 : index
    %10 = vector.load %arg5[%c0_9, %c0_10] : memref<4x1xf32, #tpu.memory_space<vmem>>, vector<4x1xf32>
    %cst_11 = arith.constant dense<0.000000e+00> : vector<4x128xf32>
    %11 = tpu.matmul %9, %8, %cst_11 {dimension_numbers = #tpu.dot_dimension_numbers<[1], [0], [0], [1], [0, 0, 1, 1], [], []>} : vector<4x32xf32>, vector<32x128xf32>, vector<4x128xf32> -> vector<4x128xf32>
    %12 = vector.broadcast %10 : vector<4x1xf32> to vector<4x128xf32>
    %13 = arith.addf %11, %12 : vector<4x128xf32>
    %14 = arith.addf %0, %13 : vector<4x128xf32>
    %c0_12 = arith.constant 0 : index
    %c0_13 = arith.constant 0 : index
    %15 = vector.load %arg6[%c0_12, %c0_13] : memref<4x128xf32, #tpu.memory_space<vmem>>, vector<4x128xf32>
    tpu.vector_store %arg6[%c0_12, %c0_13], %14 {strides = array<i32>} : memref<4x128xf32, #tpu.memory_space<vmem>>, vector<4x128xf32>,
    return
  }
  func.func @transform_0(%arg0: i32) -> (i32, i32) {
    %c0_i32 = arith.constant 0 : i32
    %c0_i32_0 = arith.constant 0 : i32
    return %c0_i32, %arg0 : i32, i32
  }
  func.func @transform_1(%arg0: i32) -> (i32, i32) {
    %c0_i32 = arith.constant 0 : i32
    %c0_i32_0 = arith.constant 0 : i32
    %c0_i32_1 = arith.constant 0 : i32
    return %c0_i32, %c0_i32_0 : i32, i32
  }
  func.func @transform_2(%arg0: i32) -> (i32, i32) {
    %c0_i32 = arith.constant 0 : i32
    %c0_i32_0 = arith.constant 0 : i32
    %c0_i32_1 = arith.constant 0 : i32
    return %c0_i32, %c0_i32_0 : i32, i32
  }
  func.func @transform_3(%arg0: i32) -> (i32, i32) {
    %c0_i32 = arith.constant 0 : i32
    %c0_i32_0 = arith.constant 0 : i32
    %c0_i32_1 = arith.constant 0 : i32
    return %c0_i32, %c0_i32_0 : i32, i32
  }
  func.func @transform_4(%arg0: i32) -> (i32, i32) {
    %c0_i32 = arith.constant 0 : i32
    %c0_i32_0 = arith.constant 0 : i32
    %c0_i32_1 = arith.constant 0 : i32
    return %c0_i32, %c0_i32_0 : i32, i32
  }
  func.func @transform_5(%arg0: i32) -> (i32, i32) {
    %c0_i32 = arith.constant 0 : i32
    %c0_i32_0 = arith.constant 0 : i32
    return %c0_i32, %arg0 : i32, i32
  }
}

</mosaic_0001>

<llo_original>
// kernel: tpu_custom_call.1
$region0: #{tpu_custom_call.1}
  #allocation0 [shape = 'u32[]', space=smem, size = 0x4, offset = 0x4, fixed_abs, tag = 'smem constant byte address 0x4 - core index']
  #allocation1 [shape = 'u32[144,128]{1,0:T(1,128)}', space=vmem, size = 0x12000, scoped, tag = 'internal scratch']
  %s0 = inlined_call_operand.vmem [shape: f32[8,256], index: 0, kind: input, shape index: {}]
  %s1 = inlined_call_operand.vmem [shape: f32[32,4], index: 1, kind: input, shape index: {}]
  %s2 = inlined_call_operand.vmem [shape: f32[32,1], index: 2, kind: input, shape index: {}]
  %s3 = inlined_call_operand.vmem [shape: f32[4,32], index: 3, kind: input, shape index: {}]
  %s4 = inlined_call_operand.vmem [shape: f32[4,1], index: 4, kind: input, shape index: {}]
  %s5 = inlined_call_operand.hbm [shape: f32[4,256], index: 5, kind: output, shape index: {}]
  %s6 = sld [smem:[#allocation0]]
  $region53: #{tpu_custom_call.1} parent=0
    _
  %s8 = ssub.s32 1, %s6
  %s9 = scalar_select 0, %s8, %s6
  $region1: #{tpu_custom_call.1} parent=0
    #allocation2 [shape = 'u8[4096]{0}', space=vmem, size = 0x1000, scoped, tag = 'output window, operand 0']
    #allocation3 [shape = 's32[2]{0}', space=sflag, size = 0x8, scoped, tag = 'scoped memory for tpu_custom_call.1']
    %10 = vsyncpa [#allocation3], 0
    %s11 = scalar_lea.sflag [#allocation3], 1
    %12 = vsyncpa %s11, 0
    loop: start=0, step=1, limit=4
    $region2: #{tpu_custom_call.1} parent=1 // loop_pre_header
      _
    $region3: #{tpu_custom_call.1} parent=1 // loop_header
      %s14 = sphi 0, %s18
      %p15 = scmp.ge.s32.totalorder %s14, 4
      %s24 = sphi 0, %s26
      %s27 = sphi 0, %s24
      %s28 = sphi 0, %s27
      %s44 = sphi 0, %s28
      %s48 = sphi 0, %s48
      %s50 = sphi 0, %s48
      %s51 = sphi 0, %s50
      %s65 = sphi 0, %s51
      %s69 = sphi 0, %s69
      %s71 = sphi 0, %s69
      %s72 = sphi 0, %s71
      %s86 = sphi 0, %s72
      %s90 = sphi 0, %s90
      %s92 = sphi 0, %s90
      %s93 = sphi 0, %s92
      %s107 = sphi 0, %s93
      %s111 = sphi 0, %s111
      %s113 = sphi 0, %s111
      %s114 = sphi 0, %s113
      %s128 = sphi 0, %s114
      %s134 = sphi 0, %s136
      %s137 = sphi 0, %s134
      %s138 = sphi 0, %s137
      %s154 = sphi 0, %s138
    $region4: #{tpu_custom_call.1} parent=1 // loop_header_branch
      %17 = sbr.rel (%p15) target = $region8
    $region5: #{tpu_custom_call.1} parent=1 // loop_body
      %s19 = ssub.s32 %s14, 1
      %s20 = ssub.s32 %s14, 2
      %s21 = sadd.s32 %s14, 1
      %s22 = ssub.s32 %s14, %s21
      %p23 = scmp.eq.s32.totalorder %s22, 0
      %s25 = sadd.s32 %s24, 1
      %s26 = scalar_select %p23, %s24, %s25
      %p29 = pneg %p23
      %p30 = scmp.eq.s32.totalorder %s14, 1
      %p31 = por %p29, %p30
      %p32 = scmp.ne.s32.totalorder %s24, %s27
      %p33 = scmp.eq.s32.totalorder %s14, 0
      %p34 = por %p32, %p33
      %p35 = scmp.ne.s32.totalorder %s24, %s27
      %p36 = scmp.eq.s32.totalorder %s19, 1
      %p37 = por %p35, %p36
      %p38 = scmp.ne.s32.totalorder %s27, %s28
      %p39 = scmp.eq.s32.totalorder %s19, 0
      %p40 = por %p38, %p39
      %p41 = scmp.ne.s32.totalorder %s27, %s28
      %p42 = scmp.eq.s32.totalorder %s20, 1
      %p43 = por %p41, %p42
      %p45 = scmp.ne.s32.totalorder %s28, %s44
      %p46 = scmp.eq.s32.totalorder %s20, 0
      %p47 = por %p45, %p46
      %s49 = sadd.s32 %s48, 1
      %p52 = scmp.eq.s32.totalorder %s14, 1
      %p53 = scmp.ne.s32.totalorder %s48, %s50
      %p54 = scmp.eq.s32.totalorder %s14, 0
      %p55 = por %p53, %p54
      %p56 = scmp.ne.s32.totalorder %s48, %s50
      %p57 = scmp.eq.s32.totalorder %s19, 1
      %p58 = por %p56, %p57
      %p59 = scmp.ne.s32.totalorder %s50, %s51
      %p60 = scmp.eq.s32.totalorder %s19, 0
      %p61 = por %p59, %p60
      %p62 = scmp.ne.s32.totalorder %s50, %s51
      %p63 = scmp.eq.s32.totalorder %s20, 1
      %p64 = por %p62, %p63
      %p66 = scmp.ne.s32.totalorder %s51, %s65
      %p67 = scmp.eq.s32.totalorder %s20, 0
      %p68 = por %p66, %p67
      %s70 = sadd.s32 %s69, 1
      %p73 = scmp.eq.s32.totalorder %s14, 1
      %p74 = scmp.ne.s32.totalorder %s69, %s71
      %p75 = scmp.eq.s32.totalorder %s14, 0
      %p76 = por %p74, %p75
      %p77 = scmp.ne.s32.totalorder %s69, %s71
      %p78 = scmp.eq.s32.totalorder %s19, 1
      %p79 = por %p77, %p78
      %p80 = scmp.ne.s32.totalorder %s71, %s72
      %p81 = scmp.eq.s32.totalorder %s19, 0
      %p82 = por %p80, %p81
      %p83 = scmp.ne.s32.totalorder %s71, %s72
      %p84 = scmp.eq.s32.totalorder %s20, 1
      %p85 = por %p83, %p84
      %p87 = scmp.ne.s32.totalorder %s72, %s86
      %p88 = scmp.eq.s32.totalorder %s20, 0
      %p89 = por %p87, %p88
      %s91 = sadd.s32 %s90, 1
      %p94 = scmp.eq.s32.totalorder %s14, 1
      %p95 = scmp.ne.s32.totalorder %s90, %s92
      %p96 = scmp.eq.s32.totalorder %s14, 0
      %p97 = por %p95, %p96
      %p98 = scmp.ne.s32.totalorder %s90, %s92
      %p99 = scmp.eq.s32.totalorder %s19, 1
      %p100 = por %p98, %p99
      %p101 = scmp.ne.s32.totalorder %s92, %s93
      %p102 = scmp.eq.s32.totalorder %s19, 0
      %p103 = por %p101, %p102
      %p104 = scmp.ne.s32.totalorder %s92, %s93
      %p105 = scmp.eq.s32.totalorder %s20, 1
      %p106 = por %p104, %p105
      %p108 = scmp.ne.s32.totalorder %s93, %s107
      %p109 = scmp.eq.s32.totalorder %s20, 0
      %p110 = por %p108, %p109
      %s112 = sadd.s32 %s111, 1
      %p115 = scmp.eq.s32.totalorder %s14, 1
      %p116 = scmp.ne.s32.totalorder %s111, %s113
      %p117 = scmp.eq.s32.totalorder %s14, 0
      %p118 = por %p116, %p117
      %p119 = scmp.ne.s32.totalorder %s111, %s113
      %p120 = scmp.eq.s32.totalorder %s19, 1
      %p121 = por %p119, %p120
      %p122 = scmp.ne.s32.totalorder %s113, %s114
      %p123 = scmp.eq.s32.totalorder %s19, 0
      %p124 = por %p122, %p123
      %p125 = scmp.ne.s32.totalorder %s113, %s114
      %p126 = scmp.eq.s32.totalorder %s20, 1
      %p127 = por %p125, %p126
      %p129 = scmp.ne.s32.totalorder %s114, %s128
      %p130 = scmp.eq.s32.totalorder %s20, 0
      %p131 = por %p129, %p130
      %s132 = ssub.s32 %s14, %s21
      %p133 = scmp.eq.s32.totalorder %s132, 0
      %s135 = sadd.s32 %s134, 1
      %s136 = scalar_select %p133, %s134, %s135
      %p139 = pneg %p133
      %p140 = scmp.eq.s32.totalorder %s14, 1
      %p141 = por %p139, %p140
      %p142 = scmp.ne.s32.totalorder %s134, %s137
      %p143 = scmp.eq.s32.totalorder %s14, 0
      %p144 = por %p142, %p143
      %p145 = scmp.ne.s32.totalorder %s134, %s137
      %p146 = scmp.eq.s32.totalorder %s19, 1
      %p147 = por %p145, %p146
      %p148 = scmp.ne.s32.totalorder %s137, %s138
      %p149 = scmp.eq.s32.totalorder %s19, 0
      %p150 = por %p148, %p149
      %p151 = scmp.ne.s32.totalorder %s137, %s138
      %p152 = scmp.eq.s32.totalorder %s20, 1
      %p153 = por %p151, %p152
      %p155 = scmp.ne.s32.totalorder %s138, %s154
      %p156 = scmp.eq.s32.totalorder %s20, 0
      %p157 = por %p155, %p156
      %p158 = scmp.le.s32.totalorder 1, %s14
      %p159 = scmp.lt.s32.totalorder %s14, 3
      %p160 = pnand %p158, %p159
      %p161 = pneg %p160
      // Predicated region
      $region9: #{tpu_custom_call.1} parent=5 // pred_check
        _
      $region10: #{tpu_custom_call.1} parent=5 // pred_check_branch
        %163 = sbr.rel (%p160) target = $region12
      $region11: #{tpu_custom_call.1} parent=5 // pred_region
        %s164 = ssub.s32 %s14, 1
        // Predicated region
        $region13: #{tpu_custom_call.1} parent=11 // pred_check
          %p165 = pneg %p61
        $region14: #{tpu_custom_call.1} parent=11 // pred_check_branch
          %167 = sbr.rel (%p165) target = $region16
        $region15: #{tpu_custom_call.1} parent=11 // pred_region
          _
        $region16: #{tpu_custom_call.1} parent=11 // pred_fallthru
          _
        // Predicated region
        $region17: #{tpu_custom_call.1} parent=11 // pred_check
          %p168 = pneg %p82
        $region18: #{tpu_custom_call.1} parent=11 // pred_check_branch
          %170 = sbr.rel (%p168) target = $region20
        $region19: #{tpu_custom_call.1} parent=11 // pred_region
          _
        $region20: #{tpu_custom_call.1} parent=11 // pred_fallthru
          _
        // Predicated region
        $region21: #{tpu_custom_call.1} parent=11 // pred_check
          %p171 = pneg %p103
        $region22: #{tpu_custom_call.1} parent=11 // pred_check_branch
          %173 = sbr.rel (%p171) target = $region24
        $region23: #{tpu_custom_call.1} parent=11 // pred_region
          _
        $region24: #{tpu_custom_call.1} parent=11 // pred_fallthru
          _
        // Predicated region
        $region25: #{tpu_custom_call.1} parent=11 // pred_check
          %p174 = pneg %p124
        $region26: #{tpu_custom_call.1} parent=11 // pred_check_branch
          %176 = sbr.rel (%p174) target = $region28
        $region27: #{tpu_custom_call.1} parent=11 // pred_region
          _
        $region28: #{tpu_custom_call.1} parent=11 // pred_fallthru
          _
      $region12: #{tpu_custom_call.1} parent=5 // pred_fallthru
        _
      %p177 = scmp.lt.s32.totalorder %s14, 2
      // Predicated region
      $region29: #{tpu_custom_call.1} parent=5 // pred_check
        %p178 = pneg %p177
      $region30: #{tpu_custom_call.1} parent=5 // pred_check_branch
        %180 = sbr.rel (%p178) target = $region32
      $region31: #{tpu_custom_call.1} parent=5 // pred_region
        // Predicated region
        $region33: #{tpu_custom_call.1} parent=31 // pred_check
          %p181 = pneg %p34
        $region34: #{tpu_custom_call.1} parent=31 // pred_check_branch
          %183 = sbr.rel (%p181) target = $region36
        $region35: #{tpu_custom_call.1} parent=31 // pred_region
          %p184 = scmp.lt.s32.totalorder %s14, 1
          %s185 = scalar_select %p184, %s14, 1
          %s186 = smul.addr %s185, 8
          %s187 = scalar_lea.vmem %s0, %s186
        $region36: #{tpu_custom_call.1} parent=31 // pred_fallthru
          _
      $region32: #{tpu_custom_call.1} parent=5 // pred_fallthru
        _
      %p188 = scmp.le.s32.totalorder 1, %s14
      %p189 = scmp.lt.s32.totalorder %s14, 3
      %p190 = pnand %p188, %p189
      %p191 = pneg %p190
      // Predicated region
      $region37: #{tpu_custom_call.1} parent=5 // pred_check
        _
      $region38: #{tpu_custom_call.1} parent=5 // pred_check_branch
        %193 = sbr.rel (%p190) target = $region40
      $region39: #{tpu_custom_call.1} parent=5 // pred_region
        %s194 = ssub.s32 %s14, 1
        %p195 = scmp.lt.s32.totalorder %s19, 1
        %s196 = scalar_select %p195, %s19, 1
        %s197 = smul.addr %s196, 8
        %s198 = scalar_lea.vmem %s0, %s197
        %p199 = pneg %p40
        %p200 = pneg %p37
        %p201 = pneg %p61
        %p202 = pneg %p58
        %p203 = pneg %p82
        %p204 = pneg %p79
        %p205 = pneg %p103
        %p206 = pneg %p100
        %p207 = pneg %p124
        %p208 = pneg %p121
        %p209 = pneg %p150
        %p210 = pneg %p147
        %s211 = sand.u32 %s137, 1
        %s212 = scalar_lea.sflag [#allocation3], %s211
        %s213 = sand.u32 %s137, 1
        %s214 = smul.addr %s213, 4
        %s215 = scalar_lea.vmem [#allocation2], %s214
        %p216 = scmp.lt.s32.totalorder %s19, 1
        %s217 = scalar_select %p216, %s19, 1
        %s218 = smul.addr %s217, 8
        %s219 = scalar_lea.vmem %s0, %s218
        %v220 = vld [vmem:[%s219] sm:$0xf]
        %v221 = vld [vmem:[%s219 + $0x4] sm:$0xf]
        %v222 = vld [vmem:[%s1] sm:$0xff]
        %v223 = vld [vmem:[%s1 + $0x8] sm:$0xff]
        %v224 = vld [vmem:[%s1 + $0x10] sm:$0xff]
        %v225 = vld [vmem:[%s1 + $0x18] sm:$0xff]
        %v226 = vld [vmem:[%s2] sm:$0xff]
        %v227 = vld [vmem:[%s2 + $0x8] sm:$0xff]
        %v228 = vld [vmem:[%s2 + $0x10] sm:$0xff]
        %v229 = vld [vmem:[%s2 + $0x18] sm:$0xff]
        %231 = vset.pattern.permute.xlu0 0
        %232 = vperm.xlu0 %231, %v226
        %v233 = vpop.permute.xlu0 %232
        %236 = vset.pattern.permute.xlu0 0
        %237 = vperm.xlu0 %236, %v227
        %v238 = vpop.permute.xlu0 %237
        %241 = vset.pattern.permute.xlu0 0
        %242 = vperm.xlu0 %241, %v228
        %v243 = vpop.permute.xlu0 %242
        %246 = vset.pattern.permute.xlu0 0
        %247 = vperm.xlu0 %246, %v229
        %v248 = vpop.permute.xlu0 %247
        %vm250 = vcmask 31744
        %v252 = vsel %vm250, %v222, 0
        %v255 = vsel %vm250, %v223, 0
        %v258 = vsel %vm250, %v224, 0
        %v261 = vsel %vm250, %v225, 0
        %vm263 = vcmask 1043456
        %v265 = vsel %vm263, %v221, 0
        %267 = vmatprep.subr.mxu0 0.0
        %268 = vmatpush1.msra.mxu0 0.0
        %269 = vmatprep.subr.mxu0 0.0
        %270 = vmatpush1.msra.mxu0 0.0
        %271 = vmatprep.subr.mxu0 0.0
        %272 = vmatpush1.msra.mxu0 0.0
        %273 = vmatprep.subr.mxu0 0.0
        %274 = vmatpush1.msra.mxu0 0.0
        %275 = vmatprep.subr.mxu0 0.0
        %276 = vmatpush1.msra.mxu0 0.0
        %277 = vmatprep.subr.mxu0 0.0
        %278 = vmatpush1.msra.mxu0 0.0
        %279 = vmatprep.subr.mxu0 0.0
        %280 = vmatpush1.msra.mxu0 0.0
        %281 = vmatprep.subr.mxu0 0.0
        %282 = vmatpush1.msra.mxu0 0.0
        %283 = vmatprep.subr.mxu0 0.0
        %284 = vmatpush1.msra.mxu0 0.0
        %285 = vmatprep.subr.mxu0 0.0
        %286 = vmatpush1.msra.mxu0 0.0
        %287 = vmatprep.subr.mxu0 0.0
        %288 = vmatpush1.msra.mxu0 0.0
        %289 = vmatprep.subr.mxu0 0.0
        %290 = vmatpush1.msra.mxu0 0.0
        %291 = vmatprep.subr.mxu0 0.0
        %292 = vmatpush1.msra.mxu0 0.0
        %293 = vmatprep.subr.mxu0 0.0
        %294 = vmatpush1.msra.mxu0 0.0
        %295 = vmatprep.subr.mxu0 0.0
        %296 = vmatpush1.msra.mxu0 0.0
        %297 = vmatprep.subr.mxu0 0.0
        %298 = vmatpush1.msra.mxu0 %v265
        %299 = vmatprep.subr.mxu0 0.0
        %300 = vmatpush2.msra.mxu0 0.0
        %301 = vmatprep.subr.mxu0 0.0
        %302 = vmatpush2.msra.mxu0 0.0
        %303 = vmatprep.subr.mxu0 0.0
        %304 = vmatpush2.msra.mxu0 0.0
        %305 = vmatprep.subr.mxu0 0.0
        %306 = vmatpush2.msra.mxu0 0.0
        %307 = vmatprep.subr.mxu0 0.0
        %308 = vmatpush2.msra.mxu0 0.0
        %309 = vmatprep.subr.mxu0 0.0
        %310 = vmatpush2.msra.mxu0 0.0
        %311 = vmatprep.subr.mxu0 0.0
        %312 = vmatpush2.msra.mxu0 0.0
        %313 = vmatprep.subr.mxu0 0.0
        %314 = vmatpush2.msra.mxu0 0.0
        %315 = vmatprep.subr.mxu0 0.0
        %316 = vmatpush2.msra.mxu0 0.0
        %317 = vmatprep.subr.mxu0 0.0
        %318 = vmatpush2.msra.mxu0 0.0
        %319 = vmatprep.subr.mxu0 0.0
        %320 = vmatpush2.msra.mxu0 0.0
        %321 = vmatprep.subr.mxu0 0.0
        %322 = vmatpush2.msra.mxu0 0.0
        %323 = vmatprep.subr.mxu0 0.0
        %324 = vmatpush2.msra.mxu0 0.0
        %325 = vmatprep.subr.mxu0 0.0
        %326 = vmatpush2.msra.mxu0 0.0
        %327 = vmatprep.subr.mxu0 0.0
        %328 = vmatpush2.msra.mxu0 0.0
        %329 = vmatprep.subr.mxu0 0.0
        %330 = vmatpush2.msra.mxu0 0.0
        %331 = vmatprep.mubr.f32.mxu0 0.0
        %332 = vmatmul.mubr.f32.gmra.mxu0 %v252
        %v333 = vpop.f32.mrf.mxu0
        %v334 = vadd.f32 %v233, %v333
        %v335 = vpop.f32.mrf.mxu0
        %336 = vmatprep.mubr.f32.mxu0 0.0
        %337 = vmatmul.mubr.f32.gmra.mxu0 %v255
        %v338 = vpop.f32.mrf.mxu0
        %v339 = vadd.f32 %v238, %v338
        %v340 = vpop.f32.mrf.mxu0
        %341 = vmatprep.mubr.f32.mxu0 0.0
        %342 = vmatmul.mubr.f32.gmra.mxu0 %v258
        %v343 = vpop.f32.mrf.mxu0
        %v344 = vadd.f32 %v243, %v343
        %v345 = vpop.f32.mrf.mxu0
        %346 = vmatprep.mubr.f32.mxu0 0.0
        %347 = vmatmul.mubr.f32.gmra.mxu0 %v261
        %v348 = vpop.f32.mrf.mxu0
        %v349 = vadd.f32 %v248, %v348
        %v350 = vpop.f32.mrf.mxu0
        %351 = vdwg.mxu0
        %v352 = vmax.f32 %v334, 0.0
        %v353 = vmax.f32 %v339, 0.0
        %v354 = vmax.f32 %v344, 0.0
        %v355 = vmax.f32 %v349, 0.0
        %v356 = vld [vmem:[%s3] sm:$0xf]
        %v357 = vld [vmem:[%s4] sm:$0xf]
        %359 = vset.pattern.permute.xlu0 0
        %360 = vperm.xlu0 %359, %v357
        %v361 = vpop.permute.xlu0 %360
        %vm363 = vcmask 261120
        %v365 = vsel %vm363, %v356, 0
        %367 = vmatprep.subr.mxu0 0.0
        %368 = vmatpush1.msra.mxu0 0.0
        %369 = vmatprep.subr.mxu0 0.0
        %370 = vmatpush1.msra.mxu0 0.0
        %371 = vmatprep.subr.mxu0 0.0
        %372 = vmatpush1.msra.mxu0 0.0
        %373 = vmatprep.subr.mxu0 0.0
        %374 = vmatpush1.msra.mxu0 0.0
        %375 = vmatprep.subr.mxu0 0.0
        %376 = vmatpush1.msra.mxu0 0.0
        %377 = vmatprep.subr.mxu0 0.0
        %378 = vmatpush1.msra.mxu0 0.0
        %379 = vmatprep.subr.mxu0 0.0
        %380 = vmatpush1.msra.mxu0 0.0
        %381 = vmatprep.subr.mxu0 0.0
        %382 = vmatpush1.msra.mxu0 0.0
        %383 = vmatprep.subr.mxu0 0.0
        %384 = vmatpush1.msra.mxu0 0.0
        %385 = vmatprep.subr.mxu0 0.0
        %386 = vmatpush1.msra.mxu0 0.0
        %387 = vmatprep.subr.mxu0 0.0
        %388 = vmatpush1.msra.mxu0 0.0
        %389 = vmatprep.subr.mxu0 0.0
        %390 = vmatpush1.msra.mxu0 0.0
        %391 = vmatprep.subr.mxu0 0.0
        %392 = vmatpush1.msra.mxu0 %v355
        %393 = vmatprep.subr.mxu0 0.0
        %394 = vmatpush1.msra.mxu0 %v354
        %395 = vmatprep.subr.mxu0 0.0
        %396 = vmatpush1.msra.mxu0 %v353
        %397 = vmatprep.subr.mxu0 0.0
        %398 = vmatpush1.msra.mxu0 %v352
        %399 = vmatprep.subr.mxu0 0.0
        %400 = vmatpush2.msra.mxu0 0.0
        %401 = vmatprep.subr.mxu0 0.0
        %402 = vmatpush2.msra.mxu0 0.0
        %403 = vmatprep.subr.mxu0 0.0
        %404 = vmatpush2.msra.mxu0 0.0
        %405 = vmatprep.subr.mxu0 0.0
        %406 = vmatpush2.msra.mxu0 0.0
        %407 = vmatprep.subr.mxu0 0.0
        %408 = vmatpush2.msra.mxu0 0.0
        %409 = vmatprep.subr.mxu0 0.0
        %410 = vmatpush2.msra.mxu0 0.0
        %411 = vmatprep.subr.mxu0 0.0
        %412 = vmatpush2.msra.mxu0 0.0
        %413 = vmatprep.subr.mxu0 0.0
        %414 = vmatpush2.msra.mxu0 0.0
        %415 = vmatprep.subr.mxu0 0.0
        %416 = vmatpush2.msra.mxu0 0.0
        %417 = vmatprep.subr.mxu0 0.0
        %418 = vmatpush2.msra.mxu0 0.0
        %419 = vmatprep.subr.mxu0 0.0
        %420 = vmatpush2.msra.mxu0 0.0
        %421 = vmatprep.subr.mxu0 0.0
        %422 = vmatpush2.msra.mxu0 0.0
        %423 = vmatprep.subr.mxu0 0.0
        %424 = vmatpush2.msra.mxu0 0.0
        %425 = vmatprep.subr.mxu0 0.0
        %426 = vmatpush2.msra.mxu0 0.0
        %427 = vmatprep.subr.mxu0 0.0
        %428 = vmatpush2.msra.mxu0 0.0
        %429 = vmatprep.subr.mxu0 0.0
        %430 = vmatpush2.msra.mxu0 0.0
        %431 = vmatprep.mubr.f32.mxu0 0.0
        %432 = vmatmul.mubr.f32.gmra.mxu0 %v365
        %v433 = vpop.f32.mrf.mxu0
        %v434 = vadd.f32 %v361, %v433
        %v435 = vpop.f32.mrf.mxu0
        %436 = vdwg.mxu0
        %v437 = vadd.f32 %v220, %v434
        %438 = vst [vmem:[%s215] sm:$0xf] %v437
        %s439 = sand.u32 %s137, 1
        %s440 = scalar_lea.sflag [#allocation3], %s439
        %s441 = sand.u32 %s137, 1
        %s442 = smul.addr %s441, 4
        %s443 = scalar_lea.vmem [#allocation2], %s442
        // Predicated region
        $region41: #{tpu_custom_call.1} parent=39 // pred_check
          %p444 = pneg %p147
        $region42: #{tpu_custom_call.1} parent=39 // pred_check_branch
          %446 = sbr.rel (%p444) target = $region44
        $region43: #{tpu_custom_call.1} parent=39 // pred_region
          %s448 = ssub.s32 64, 64
          %449 = vsyncadd %s440, %s448
          %s450 = smul.addr %s19, 64
          %s451 = scalar_lea.hbm %s5, %s450
          %s453 = sshll.u32 %s443, 4
          %s454 = int_to_ptr.vmem [resolvable:$true] %s453
          %456 = dma.vmem_to_hbm [thread:$0]  %s454, 64, %s451, %s440
        $region44: #{tpu_custom_call.1} parent=39 // pred_fallthru
          _
      $region40: #{tpu_custom_call.1} parent=5 // pred_fallthru
        _
      %p457 = scmp.le.s32.totalorder 2, %s14
      // Predicated region
      $region45: #{tpu_custom_call.1} parent=5 // pred_check
        %p458 = pneg %p457
      $region46: #{tpu_custom_call.1} parent=5 // pred_check_branch
        %460 = sbr.rel (%p458) target = $region48
      $region47: #{tpu_custom_call.1} parent=5 // pred_region
        %s461 = ssub.s32 %s14, 2
        // Predicated region
        $region49: #{tpu_custom_call.1} parent=47 // pred_check
          %p462 = pneg %p153
        $region50: #{tpu_custom_call.1} parent=47 // pred_check_branch
          %464 = sbr.rel (%p462) target = $region52
        $region51: #{tpu_custom_call.1} parent=47 // pred_region
          %s465 = sand.u32 %s138, 1
          %s466 = scalar_lea.sflag [#allocation3], %s465
          %s467 = sand.u32 %s138, 1
          %s468 = smul.addr %s467, 4
          %s469 = scalar_lea.vmem [#allocation2], %s468
          %470 = dma.done %s466, 64
        $region52: #{tpu_custom_call.1} parent=47 // pred_fallthru
          _
      $region48: #{tpu_custom_call.1} parent=5 // pred_fallthru
        _
    $region6: #{tpu_custom_call.1} parent=1 // loop_footer
      %s18 = sadd.s32 1, %s14
    $region7: #{tpu_custom_call.1} parent=1 // loop_footer_branch
      %13 = sbr.rel target = $region3
    $region8: #{tpu_custom_call.1} parent=1 // loop_exit
      _
    %471 = vsyncpa [#allocation3], 1
    %s472 = scalar_lea.sflag [#allocation3], 1
    %473 = vsyncpa %s472, 1

</llo_original>
